<compile_context>
chip_gen: v5e
topology: v5e:2x2
jax: 0.10.0
libtpu: 0.0.40
codegen_flags: <defaults>
</compile_context>

<pallas_src>
import jax
import jax.numpy as jnp
from jax.experimental import pallas as pl
from jax.experimental.pallas import tpu as pltpu


def _build_band_weights(w_oihw, W):
    """Fold upsample+3x3 conv into 3 banded per-row-offset weight matrices.

    Pixel-shuffle identity: the 3x3 / pad-1 conv on the nearest-2x upsampled image
    equals 4 interleaved output "phases", each a linear map of the SAME 3x3
    neighbourhood of the ORIGINAL-resolution image, with kernel-index -> tap-offset
    mapping  phase 0: (0,1,1)  /  phase 1: (1,1,2).

    Returns wband of shape (3, (W+2)*Cin, W*4*Cout) with
      wband[dh, (b+dw)*Cin + ci, b*(4*Cout) + (2*dp+dq)*Cout + co]
        = sum over (kh,kw) mapping to offsets (dh,dw) of w[co, ci, kh, kw].
    """
    Cout, Cin, _, _ = w_oihw.shape
    Nout = 4 * Cout
    offmap = ((0, 1, 1), (1, 1, 2))  # offmap[phase][kernel_idx] -> tap offset (0..2)

    # Per-phase tap weights: wtap[dh, dw, ci, phase, co]
    wtap = jnp.zeros((3, 3, Cin, 4, Cout), w_oihw.dtype)
    for dp in range(2):
        for dq in range(2):
            ph = dp * 2 + dq
            for kh in range(3):
                for kw in range(3):
                    dh = offmap[dp][kh]
                    dw = offmap[dq][kw]
                    wtap = wtap.at[dh, dw, :, ph, :].add(w_oihw[:, :, kh, kw].T)

    # Banded matrix covering all W output columns and all 3 column taps at once.
    wband = jnp.zeros((3, (W + 2) * Cin, W * Nout), w_oihw.dtype)
    for b in range(W):
        for dw in range(3):
            wband = wband.at[
                :, (b + dw) * Cin:(b + dw + 1) * Cin, b * Nout:(b + 1) * Nout
            ].set(wtap[:, dw].reshape(3, Cin, Nout))
    return wband


def upsample_conv3x3_kernel(x_ref, w_ref, b_ref, o_ref, xpad_ref):
    # x_ref    : (NB, H, W*Cin)            original-resolution rows, lane-dense
    # w_ref    : (3, (W+2)*Cin, W*4*Cout)  banded per-row-offset weights
    # b_ref    : (1, W*4*Cout)             bias replicated per column & phase
    # o_ref    : (NB*H, W*4*Cout)          lane-dense output rows
    # xpad_ref : VMEM (NB, H+2, (W+2)*Cin) zero-padded row scratch (pad fused here)
    NB, H, WCin = x_ref.shape
    _, WPCin, WNout = w_ref.shape
    Cin = (WPCin - WCin) // 2
    M = NB * H

    # Zero only the 1-pixel halo (cheap); the interior is overwritten every step.
    zrow = jnp.zeros((NB, 1, WPCin), xpad_ref.dtype)
    xpad_ref[:, 0:1, :] = zrow
    xpad_ref[:, H + 1:H + 2, :] = zrow
    zcol = jnp.zeros((NB, H, Cin), xpad_ref.dtype)
    xpad_ref[:, 1:H + 1, 0:Cin] = zcol
    xpad_ref[:, 1:H + 1, WPCin - Cin:WPCin] = zcol

    # Interior copy: the padded image never touches HBM.
    xpad_ref[:, 1:H + 1, Cin:Cin + WCin] = x_ref[...]

    # Three MXU dots (one per kernel-row offset); each LHS is a sublane-shifted
    # slice of the padded scratch -- no im2col scratch, no strided relayouts.
    acc = jnp.zeros((M, WNout), jnp.float32)
    for dh in range(3):
        lhs = xpad_ref[:, dh:dh + H, :].reshape(M, WPCin)
        acc = acc + jnp.dot(lhs, w_ref[dh], preferred_element_type=jnp.float32)

    acc = acc + b_ref[...]
    o_ref[...] = acc.astype(o_ref.dtype)


@jax.jit
def attention_upsample(x_nchw, weight_oihw, bias):
    """Equivalent of AttentionUpsample.forward.

    x_nchw      : (N, Cin, H, W)      -- Cin == positional_coding
    weight_oihw : (Cout, Cin, 3, 3)   -- Cout == in_channels (PyTorch OIHW)
    bias        : (Cout,)
    returns     : (N, Cout, 2H, 2W)
    """
    N, Cin, H, W = x_nchw.shape
    Cout = weight_oihw.shape[0]
    Nout = 4 * Cout
    WCin = W * Cin
    WPCin = (W + 2) * Cin
    WNout = W * Nout

    # Batch folding: keep >=2 grid steps whenever N >= 2 (megacore on v7x,
    # pipeline overlap), but fold several images per step for larger N.
    NB = max(1, min((N + 1) // 2, 32)) if N >= 2 else 1
    G = (N + NB - 1) // NB

    # NCHW -> lane-dense (N, H, W*Cin) rows on the ORIGINAL (small) tensor only.
    x_rows = jnp.transpose(x_nchw, (0, 2, 3, 1)).reshape(N, H, WCin)
    if G * NB != N:
        x_rows = jnp.pad(x_rows, ((0, G * NB - N), (0, 0), (0, 0)))

    wband = _build_band_weights(weight_oihw, W)                 # (3, WPCin, WNout)
    b_eff = jnp.tile(jnp.tile(bias, 4), W).reshape(1, WNout)    # per column & phase

    grid_spec = pltpu.PrefetchScalarGridSpec(
        num_scalar_prefetch=0,
        grid=(G,),
        in_specs=[
            pl.BlockSpec((NB, H, WCin), lambda g: (g, 0, 0)),
            pl.BlockSpec((3, WPCin, WNout), lambda g: (0, 0, 0)),
            pl.BlockSpec((1, WNout), lambda g: (0, 0)),
        ],
        out_specs=pl.BlockSpec((NB * H, WNout), lambda g: (g, 0)),
        scratch_shapes=[pltpu.VMEM((NB, H + 2, WPCin), x_nchw.dtype)],
    )

    cost = pl.CostEstimate(
        flops=2 * G * NB * H * 3 * WPCin * WNout,
        transcendentals=0,
        bytes_accessed=4 * (G * NB * H * WCin + 3 * WPCin * WNout
                            + WNout + G * NB * H * WNout),
    )

    out2d = pl.pallas_call(
        upsample_conv3x3_kernel,
        out_shape=jax.ShapeDtypeStruct((G * NB * H, WNout), x_nchw.dtype),
        grid_spec=grid_spec,
        compiler_params=pltpu.CompilerParams(
            dimension_semantics=("parallel",)),
        cost_estimate=cost,
    )(x_rows, wband, b_eff)

    # Tiny pixel-shuffle: interleave the 4 phases into the 2H x 2W output (NCHW).
    out2d = out2d[: N * H]
    y = out2d.reshape(N, H, W, 2, 2, Cout)
    y = jnp.transpose(y, (0, 5, 1, 3, 2, 4))        # (N, Cout, H, 2, W, 2)
    return y.reshape(N, Cout, 2 * H, 2 * W)


def reference_upsample_conv(x_nchw, weight_oihw, bias):
    """Plain-JAX reference (mirrors PyTorch Upsample(nearest, 2x) + Conv2d)."""
    x_up = jnp.repeat(jnp.repeat(x_nchw, 2, axis=2), 2, axis=3)
    y = jax.lax.conv_general_dilated(
        x_up, weight_oihw, window_strides=(1, 1), padding=((1, 1), (1, 1)),
        dimension_numbers=("NCHW", "OIHW", "NCHW"))
    return y + bias.reshape(1, -1, 1, 1)


if __name__ == "__main__":
    # Module config: positional_coding = 32 (input channels), in_channels = 4 (output).
    positional_coding = 32
    in_channels = 4
    N, H, W = 2, 8, 8

    key = jax.random.PRNGKey(0)
    kx, kw, kb = jax.random.split(key, 3)

    x = jax.random.normal(kx, (N, positional_coding, H, W), dtype=jnp.float32)

    # Deterministic Conv2d parameter init (uniform, scaled by 1/sqrt(fan_in)),
    # matching nn.Conv2d(positional_coding, in_channels, 3, 1, 1).
    fan_in = positional_coding * 3 * 3
    bound = 1.0 / (fan_in ** 0.5)
    weight = jax.random.uniform(
        kw, (in_channels, positional_coding, 3, 3),
        minval=-bound, maxval=bound, dtype=jnp.float32)
    bias = jax.random.uniform(
        kb, (in_channels,), minval=-bound, maxval=bound, dtype=jnp.float32)

    out = attention_upsample(x, weight, bias)
    out = jax.block_until_ready(out)

    assert out.shape == (N, in_channels, 2 * H, 2 * W), out.shape

    ref = jax.block_until_ready(reference_upsample_conv(x, weight, bias))
    assert jnp.allclose(out, ref, atol=1e-4, rtol=1e-4), float(
        jnp.max(jnp.abs(out - ref)))

    print("KERNEL_OK")
</pallas_src>

<mosaic_0001>
module attributes {stable_mosaic.version = 11 : i64} {
  func.func @upsample_conv3x3_kernel(%arg0: i32, %arg1: memref<1x8x256xf32, #tpu.memory_space<vmem>>, %arg2: memref<3x320x128xf32, #tpu.memory_space<vmem>>, %arg3: memref<1x128xf32, #tpu.memory_space<vmem>>, %arg4: memref<8x128xf32, #tpu.memory_space<vmem>>, %arg5: memref<1x10x320xf32, #tpu.memory_space<vmem>>) attributes {dimension_semantics = [#tpu.dimension_semantics<parallel>], iteration_bounds = array<i64: 2>, scalar_prefetch = 0 : i64, scratch_operands = 1 : i64, tpu.core_type = #tpu.core_type<tc>, window_params = [{transform_indices = @transform_0, window_bounds = array<i64: 1, 8, 256>}, {pipeline_mode = #tpu.pipeline_mode<synchronous>, transform_indices = @transform_1, window_bounds = array<i64: 3, 320, 128>}, {pipeline_mode = #tpu.pipeline_mode<synchronous>, transform_indices = @transform_2, window_bounds = array<i64: 1, 128>}, {transform_indices = @transform_3, window_bounds = array<i64: 8, 128>}]} {
    %cst = arith.constant 0.000000e+00 : f32
    %0 = vector.broadcast %cst : f32 to vector<1x1x320xf32>
    %c0 = arith.constant 0 : index
    %c0_0 = arith.constant 0 : index
    %c0_1 = arith.constant 0 : index
    %1 = vector.load %arg5[%c0, %c0_0, %c0_1] : memref<1x10x320xf32, #tpu.memory_space<vmem>>, vector<1x1x320xf32>
    tpu.vector_store %arg5[%c0, %c0_0, %c0_1], %0 {strides = array<i32>} : memref<1x10x320xf32, #tpu.memory_space<vmem>>, vector<1x1x320xf32>,
    %c0_2 = arith.constant 0 : index
    %c9 = arith.constant 9 : index
    %c0_3 = arith.constant 0 : index
    %2 = vector.load %arg5[%c0_2, %c9, %c0_3] : memref<1x10x320xf32, #tpu.memory_space<vmem>>, vector<1x1x320xf32>
    tpu.vector_store %arg5[%c0_2, %c9, %c0_3], %0 {strides = array<i32>} : memref<1x10x320xf32, #tpu.memory_space<vmem>>, vector<1x1x320xf32>,
    %cst_4 = arith.constant 0.000000e+00 : f32
    %3 = vector.broadcast %cst_4 : f32 to vector<1x8x32xf32>
    %c0_5 = arith.constant 0 : index
    %c1 = arith.constant 1 : index
    %c0_6 = arith.constant 0 : index
    %4 = vector.load %arg5[%c0_5, %c1, %c0_6] : memref<1x10x320xf32, #tpu.memory_space<vmem>>, vector<1x8x32xf32>
    tpu.vector_store %arg5[%c0_5, %c1, %c0_6], %3 {strides = array<i32>} : memref<1x10x320xf32, #tpu.memory_space<vmem>>, vector<1x8x32xf32>,
    %c0_7 = arith.constant 0 : index
    %c1_8 = arith.constant 1 : index
    %c288 = arith.constant 288 : index
    %5 = vector.load %arg5[%c0_7, %c1_8, %c288] : memref<1x10x320xf32, #tpu.memory_space<vmem>>, vector<1x8x32xf32>
    tpu.vector_store %arg5[%c0_7, %c1_8, %c288], %3 {strides = array<i32>} : memref<1x10x320xf32, #tpu.memory_space<vmem>>, vector<1x8x32xf32>,
    %c0_9 = arith.constant 0 : index
    %c0_10 = arith.constant 0 : index
    %c0_11 = arith.constant 0 : index
    %6 = vector.load %arg1[%c0_9, %c0_10, %c0_11] : memref<1x8x256xf32, #tpu.memory_space<vmem>>, vector<1x8x256xf32>
    %c0_12 = arith.constant 0 : index
    %c1_13 = arith.constant 1 : index
    %c32 = arith.constant 32 : index
    %7 = vector.load %arg5[%c0_12, %c1_13, %c32] : memref<1x10x320xf32, #tpu.memory_space<vmem>>, vector<1x8x256xf32>
    tpu.vector_store %arg5[%c0_12, %c1_13, %c32], %6 {strides = array<i32>} : memref<1x10x320xf32, #tpu.memory_space<vmem>>, vector<1x8x256xf32>,
    %cst_14 = arith.constant 0.000000e+00 : f32
    %8 = vector.broadcast %cst_14 : f32 to vector<8x128xf32>
    %c0_15 = arith.constant 0 : index
    %c0_16 = arith.constant 0 : index
    %c0_17 = arith.constant 0 : index
    %9 = vector.load %arg5[%c0_15, %c0_16, %c0_17] : memref<1x10x320xf32, #tpu.memory_space<vmem>>, vector<1x8x320xf32>
    %10 = vector.shape_cast %9 : vector<1x8x320xf32> to vector<8x320xf32>
    %c0_18 = arith.constant 0 : index
    %c0_19 = arith.constant 0 : index
    %c0_20 = arith.constant 0 : index
    %11 = vector.load %arg2[%c0_18, %c0_19, %c0_20] : memref<3x320x128xf32, #tpu.memory_space<vmem>>, vector<1x320x128xf32>
    %12 = vector.shape_cast %11 : vector<1x320x128xf32> to vector<320x128xf32>
    %cst_21 = arith.constant dense<0.000000e+00> : vector<8x128xf32>
    %13 = tpu.matmul %10, %12, %cst_21 {dimension_numbers = #tpu.dot_dimension_numbers<[1], [0], [0], [1], [0, 0, 1, 1], [], []>} : vector<8x320xf32>, vector<320x128xf32>, vector<8x128xf32> -> vector<8x128xf32>
    %14 = arith.addf %8, %13 : vector<8x128xf32>
    %c0_22 = arith.constant 0 : index
    %c1_23 = arith.constant 1 : index
    %c0_24 = arith.constant 0 : index
    %15 = vector.load %arg5[%c0_22, %c1_23, %c0_24] : memref<1x10x320xf32, #tpu.memory_space<vmem>>, vector<1x8x320xf32>
    %16 = vector.shape_cast %15 : vector<1x8x320xf32> to vector<8x320xf32>
    %c1_25 = arith.constant 1 : index
    %c0_26 = arith.constant 0 : index
    %c0_27 = arith.constant 0 : index
    %17 = vector.load %arg2[%c1_25, %c0_26, %c0_27] : memref<3x320x128xf32, #tpu.memory_space<vmem>>, vector<1x320x128xf32>
    %18 = vector.shape_cast %17 : vector<1x320x128xf32> to vector<320x128xf32>
    %cst_28 = arith.constant dense<0.000000e+00> : vector<8x128xf32>
    %19 = tpu.matmul %16, %18, %cst_28 {dimension_numbers = #tpu.dot_dimension_numbers<[1], [0], [0], [1], [0, 0, 1, 1], [], []>} : vector<8x320xf32>, vector<320x128xf32>, vector<8x128xf32> -> vector<8x128xf32>
    %20 = arith.addf %14, %19 : vector<8x128xf32>
    %c0_29 = arith.constant 0 : index
    %c2 = arith.constant 2 : index
    %c0_30 = arith.constant 0 : index
    %21 = vector.load %arg5[%c0_29, %c2, %c0_30] : memref<1x10x320xf32, #tpu.memory_space<vmem>>, vector<1x8x320xf32>
    %22 = vector.shape_cast %21 : vector<1x8x320xf32> to vector<8x320xf32>
    %c2_31 = arith.constant 2 : index
    %c0_32 = arith.constant 0 : index
    %c0_33 = arith.constant 0 : index
    %23 = vector.load %arg2[%c2_31, %c0_32, %c0_33] : memref<3x320x128xf32, #tpu.memory_space<vmem>>, vector<1x320x128xf32>
    %24 = vector.shape_cast %23 : vector<1x320x128xf32> to vector<320x128xf32>
    %cst_34 = arith.constant dense<0.000000e+00> : vector<8x128xf32>
    %25 = tpu.matmul %22, %24, %cst_34 {dimension_numbers = #tpu.dot_dimension_numbers<[1], [0], [0], [1], [0, 0, 1, 1], [], []>} : vector<8x320xf32>, vector<320x128xf32>, vector<8x128xf32> -> vector<8x128xf32>
    %26 = arith.addf %20, %25 : vector<8x128xf32>
    %c0_35 = arith.constant 0 : index
    %c0_36 = arith.constant 0 : index
    %27 = vector.load %arg3[%c0_35, %c0_36] : memref<1x128xf32, #tpu.memory_space<vmem>>, vector<1x128xf32>
    %28 = vector.broadcast %27 : vector<1x128xf32> to vector<8x128xf32>
    %29 = arith.addf %26, %28 : vector<8x128xf32>
    %c0_37 = arith.constant 0 : index
    %c0_38 = arith.constant 0 : index
    %30 = vector.load %arg4[%c0_37, %c0_38] : memref<8x128xf32, #tpu.memory_space<vmem>>, vector<8x128xf32>
    tpu.vector_store %arg4[%c0_37, %c0_38], %29 {strides = array<i32>} : memref<8x128xf32, #tpu.memory_space<vmem>>, vector<8x128xf32>,
    return
  }
  func.func @transform_0(%arg0: i32) -> (i32, i32, i32) {
    %c0_i32 = arith.constant 0 : i32
    %c0_i32_0 = arith.constant 0 : i32
    %c0_i32_1 = arith.constant 0 : i32
    return %arg0, %c0_i32, %c0_i32_0 : i32, i32, i32
  }
  func.func @transform_1(%arg0: i32) -> (i32, i32, i32) {
    %c0_i32 = arith.constant 0 : i32
    %c0_i32_0 = arith.constant 0 : i32
    %c0_i32_1 = arith.constant 0 : i32
    %c0_i32_2 = arith.constant 0 : i32
    return %c0_i32, %c0_i32_0, %c0_i32_1 : i32, i32, i32
  }
  func.func @transform_2(%arg0: i32) -> (i32, i32) {
    %c0_i32 = arith.constant 0 : i32
    %c0_i32_0 = arith.constant 0 : i32
    %c0_i32_1 = arith.constant 0 : i32
    return %c0_i32, %c0_i32_0 : i32, i32
  }
  func.func @transform_3(%arg0: i32) -> (i32, i32) {
    %c0_i32 = arith.constant 0 : i32
    %c0_i32_0 = arith.constant 0 : i32
    return %arg0, %c0_i32 : i32, i32
  }
}

</mosaic_0001>

<llo_original>
// kernel: tile.12
$region0: #{tile.12}
  #allocation0 [shape = 's32[1]{0}', space=sflag, size = 0x4, scoped, tag = 'scoped memory for tile.12']
  %s0 = inlined_call_operand.vmem [shape: f32[4], index: 0, kind: input, shape index: {}]
  %s1 = inlined_call_operand.vmem [shape: f32[4,4], index: 1, kind: output, shape index: {}]
  // Predicated region
  $region2: #{tile.12} parent=0 // pred_check
    _
  $region3: #{tile.12} parent=0 // pred_check_branch
    %3 = sbr.rel (0) target = $region5
  $region4: #{tile.12} parent=0 // pred_region
    _
  $region5: #{tile.12} parent=0 // pred_fallthru
    _
  %v4 = vld [vmem:[%s0] ss:$0 sm:$0xff]
  %5 = vst [vmem:[%s1] sm:$0xf] %v4

// kernel: tile.15
$region0: #{tile.15}
  %s0 = inlined_call_operand.vmem [shape: f32[4,4], index: 0, kind: input, shape index: {}]
  %s1 = inlined_call_operand.vmem [shape: f32[16], index: 1, kind: output, shape index: {}]
  $region1: #{tile.15} parent=0
    #allocation0 [shape = 'u8[4096]{0}', space=vmem, size = 0x1000, scoped, tag = 'scoped mem for output reshape']
    #allocation1 [shape = 'u8[4096]{0}', space=vmem, size = 0x1000, scoped, tag = 'scoped mem for input reshape']
    %s3 = ssub.s32 16, 1
    %v4 = vld [vmem:[%s0] sm:%s3]
    %5 = vst [vmem:[#allocation1] sm:%s3] %v4
    %v6 = vld [vmem:[#allocation1] sm:$0x1]
    %vm7 = vcmask 31744
    %8 = vst.msk [vmem:[#allocation0] sm:$0x1] %vm7, %v6
    %s9 = scalar_lea.vmem [#allocation1], 3
    %v10 = vld [vmem:[%s9] sm:$0x1]
    %11 = vrot.lane.b32.xlu0 %v10, 12
    %v12 = vpop.permute.xlu0 %11
    %vm13 = vcmask 130144
    %14 = vst.msk [vmem:[#allocation0] sm:$0x1] %vm13, %v12
    %s15 = scalar_lea.vmem [#allocation1], 2
    %v16 = vld [vmem:[%s15] sm:$0x1]
    %17 = vrot.lane.b32.xlu0 %v16, 8
    %v18 = vpop.permute.xlu0 %17
    %vm19 = vcmask 97344
    %20 = vst.msk [vmem:[#allocation0] sm:$0x1] %vm19, %v18
    %s21 = scalar_lea.vmem [#allocation1], 1
    %v22 = vld [vmem:[%s21] sm:$0x1]
    %23 = vrot.lane.b32.xlu0 %v22, 4
    %v24 = vpop.permute.xlu0 %23
    %vm25 = vcmask 64544
    %26 = vst.msk [vmem:[#allocation0] sm:$0x1] %vm25, %v24
    %s28 = ssub.s32 2, 1
    %v29 = vld [vmem:[#allocation0] sm:%s28]
    %s31 = ssub.s32 2, 1
    %32 = vst [vmem:[%s1] sm:%s31] %v29

// kernel: tile.16
$region0: #{tile.16}
  #allocation0 [shape = 's32[1]{0}', space=sflag, size = 0x4, scoped, tag = 'scoped memory for tile.16']
  %s0 = inlined_call_operand.vmem [shape: f32[16], index: 0, kind: input, shape index: {}]
  %s1 = inlined_call_operand.vmem [shape: f32[8,16], index: 1, kind: output, shape index: {}]
  // Predicated region
  $region2: #{tile.16} parent=0 // pred_check
    _
  $region3: #{tile.16} parent=0 // pred_check_branch
    %3 = sbr.rel (0) target = $region5
  $region4: #{tile.16} parent=0 // pred_region
    _
  $region5: #{tile.16} parent=0 // pred_fallthru
    _
  %v4 = vld [vmem:[%s0] ss:$0 sm:$0xff]
  %5 = vst [vmem:[%s1] sm:$0xff] %v4

// kernel: tile.17
$region0: #{tile.17}
  %s0 = inlined_call_operand.vmem [shape: f32[8,16], index: 0, kind: input, shape index: {}]
  %s1 = inlined_call_operand.vmem [shape: f32[1,128], index: 1, kind: output, shape index: {}]
  $region1: #{tile.17} parent=0
    #allocation0 [shape = 'u8[4096]{0}', space=vmem, size = 0x1000, scoped, tag = 'scoped mem for output reshape']
    %v2 = vld [vmem:[%s0] sm:$0x1]
    %vm3 = vcmask 130048
    %4 = vst.msk [vmem:[#allocation0] sm:$0x1] %vm3, %v2
    %s5 = scalar_lea.vmem %s0, 7
    %v6 = vld [vmem:[%s5] sm:$0x1]
    %7 = vrot.lane.b32.xlu0 %v6, 112
    %v8 = vpop.permute.xlu0 %7
    %vm9 = vcmask 1048448
    %10 = vst.msk [vmem:[#allocation0] sm:$0x1] %vm9, %v8
    %s11 = scalar_lea.vmem %s0, 6
    %v12 = vld [vmem:[%s11] sm:$0x1]
    %13 = vrot.lane.b32.xlu0 %v12, 96
    %v14 = vpop.permute.xlu0 %13
    %vm15 = vcmask 917248
    %16 = vst.msk [vmem:[#allocation0] sm:$0x1] %vm15, %v14
    %s17 = scalar_lea.vmem %s0, 5
    %v18 = vld [vmem:[%s17] sm:$0x1]
    %19 = vrot.lane.b32.xlu0 %v18, 80
    %v20 = vpop.permute.xlu0 %19
    %vm21 = vcmask 786048
    %22 = vst.msk [vmem:[#allocation0] sm:$0x1] %vm21, %v20
    %s23 = scalar_lea.vmem %s0, 4
    %v24 = vld [vmem:[%s23] sm:$0x1]
    %25 = vrot.lane.b32.xlu0 %v24, 64
    %v26 = vpop.permute.xlu0 %25
    %vm27 = vcmask 654848
    %28 = vst.msk [vmem:[#allocation0] sm:$0x1] %vm27, %v26
    %s29 = scalar_lea.vmem %s0, 3
    %v30 = vld [vmem:[%s29] sm:$0x1]
    %31 = vrot.lane.b32.xlu0 %v30, 48
    %v32 = vpop.permute.xlu0 %31
    %vm33 = vcmask 523648
    %34 = vst.msk [vmem:[#allocation0] sm:$0x1] %vm33, %v32
    %s35 = scalar_lea.vmem %s0, 2
    %v36 = vld [vmem:[%s35] sm:$0x1]
    %37 = vrot.lane.b32.xlu0 %v36, 32
    %v38 = vpop.permute.xlu0 %37
    %vm39 = vcmask 392448
    %40 = vst.msk [vmem:[#allocation0] sm:$0x1] %vm39, %v38
    %s41 = scalar_lea.vmem %s0, 1
    %v42 = vld [vmem:[%s41] sm:$0x1]
    %43 = vrot.lane.b32.xlu0 %v42, 16
    %v44 = vpop.permute.xlu0 %43
    %vm45 = vcmask 261248
    %46 = vst.msk [vmem:[#allocation0] sm:$0x1] %vm45, %v44
    %s48 = ssub.s32 2, 1
    %v49 = vld [vmem:[#allocation0] sm:%s48]
    %s51 = ssub.s32 2, 1
    %52 = vst [vmem:[%s1] sm:%s51] %v49

// kernel: attention_upsample.1
$region0: #{attention_upsample.1}
  #allocation0 [shape = 'u32[]', space=smem, size = 0x4, offset = 0x4, fixed_abs, tag = 'smem constant byte address 0x4 - core index']
  #allocation1 [shape = 'u32[72,128]{1,0:T(1,128)}', space=vmem, size = 0x9000, scoped, tag = 'internal scratch']
  #allocation2 [shape = 'f32[1,10,320]{2,1,0:T(8,128)}', space=vmem, size = 0x6000, scoped, tag = 'scratch operand']
  %s0 = inlined_call_operand.vmem [shape: f32[2,8,256], index: 0, kind: input, shape index: {}]
  %s1 = inlined_call_operand.vmem [shape: f32[3,320,128], index: 1, kind: input, shape index: {}]
  %s2 = inlined_call_operand.vmem [shape: f32[1,128], index: 2, kind: input, shape index: {}]
  %s3 = inlined_call_operand.vmem [shape: f32[16,128], index: 3, kind: output, shape index: {}]
  %s4 = sld [smem:[#allocation0]]
  $region45: #{attention_upsample.1} parent=0
    _
  %s6 = ssub.s32 1, %s4
  %s7 = scalar_select 0, %s6, %s4
  loop: start=0, step=1, limit=4
  $region2: #{attention_upsample.1} parent=0 // loop_pre_header
    _
  $region3: #{attention_upsample.1} parent=0 // loop_header
    %s9 = sphi 0, %s13
    %p10 = scmp.ge.s32.totalorder %s9, 4
    %s19 = sphi 0, %s21
    %s22 = sphi 0, %s19
    %s23 = sphi 0, %s22
    %s39 = sphi 0, %s23
    %s43 = sphi 0, %s43
    %s45 = sphi 0, %s43
    %s46 = sphi 0, %s45
    %s60 = sphi 0, %s46
    %s64 = sphi 0, %s64
    %s66 = sphi 0, %s64
    %s67 = sphi 0, %s66
    %s81 = sphi 0, %s67
    %s87 = sphi 0, %s89
    %s90 = sphi 0, %s87
    %s91 = sphi 0, %s90
    %s107 = sphi 0, %s91
  $region4: #{attention_upsample.1} parent=0 // loop_header_branch
    %12 = sbr.rel (%p10) target = $region8
  $region5: #{attention_upsample.1} parent=0 // loop_body
    %s14 = ssub.s32 %s9, 1
    %s15 = ssub.s32 %s9, 2
    %s16 = sadd.s32 %s9, 1
    %s17 = ssub.s32 %s9, %s16
    %p18 = scmp.eq.s32.totalorder %s17, 0
    %s20 = sadd.s32 %s19, 1
    %s21 = scalar_select %p18, %s19, %s20
    %p24 = pneg %p18
    %p25 = scmp.eq.s32.totalorder %s9, 1
    %p26 = por %p24, %p25
    %p27 = scmp.ne.s32.totalorder %s19, %s22
    %p28 = scmp.eq.s32.totalorder %s9, 0
    %p29 = por %p27, %p28
    %p30 = scmp.ne.s32.totalorder %s19, %s22
    %p31 = scmp.eq.s32.totalorder %s14, 1
    %p32 = por %p30, %p31
    %p33 = scmp.ne.s32.totalorder %s22, %s23
    %p34 = scmp.eq.s32.totalorder %s14, 0
    %p35 = por %p33, %p34
    %p36 = scmp.ne.s32.totalorder %s22, %s23
    %p37 = scmp.eq.s32.totalorder %s15, 1
    %p38 = por %p36, %p37
    %p40 = scmp.ne.s32.totalorder %s23, %s39
    %p41 = scmp.eq.s32.totalorder %s15, 0
    %p42 = por %p40, %p41
    %s44 = sadd.s32 %s43, 1
    %p47 = scmp.eq.s32.totalorder %s9, 1
    %p48 = scmp.ne.s32.totalorder %s43, %s45
    %p49 = scmp.eq.s32.totalorder %s9, 0
    %p50 = por %p48, %p49
    %p51 = scmp.ne.s32.totalorder %s43, %s45
    %p52 = scmp.eq.s32.totalorder %s14, 1
    %p53 = por %p51, %p52
    %p54 = scmp.ne.s32.totalorder %s45, %s46
    %p55 = scmp.eq.s32.totalorder %s14, 0
    %p56 = por %p54, %p55
    %p57 = scmp.ne.s32.totalorder %s45, %s46
    %p58 = scmp.eq.s32.totalorder %s15, 1
    %p59 = por %p57, %p58
    %p61 = scmp.ne.s32.totalorder %s46, %s60
    %p62 = scmp.eq.s32.totalorder %s15, 0
    %p63 = por %p61, %p62
    %s65 = sadd.s32 %s64, 1
    %p68 = scmp.eq.s32.totalorder %s9, 1
    %p69 = scmp.ne.s32.totalorder %s64, %s66
    %p70 = scmp.eq.s32.totalorder %s9, 0
    %p71 = por %p69, %p70
    %p72 = scmp.ne.s32.totalorder %s64, %s66
    %p73 = scmp.eq.s32.totalorder %s14, 1
    %p74 = por %p72, %p73
    %p75 = scmp.ne.s32.totalorder %s66, %s67
    %p76 = scmp.eq.s32.totalorder %s14, 0
    %p77 = por %p75, %p76
    %p78 = scmp.ne.s32.totalorder %s66, %s67
    %p79 = scmp.eq.s32.totalorder %s15, 1
    %p80 = por %p78, %p79
    %p82 = scmp.ne.s32.totalorder %s67, %s81
    %p83 = scmp.eq.s32.totalorder %s15, 0
    %p84 = por %p82, %p83
    %s85 = ssub.s32 %s9, %s16
    %p86 = scmp.eq.s32.totalorder %s85, 0
    %s88 = sadd.s32 %s87, 1
    %s89 = scalar_select %p86, %s87, %s88
    %p92 = pneg %p86
    %p93 = scmp.eq.s32.totalorder %s9, 1
    %p94 = por %p92, %p93
    %p95 = scmp.ne.s32.totalorder %s87, %s90
    %p96 = scmp.eq.s32.totalorder %s9, 0
    %p97 = por %p95, %p96
    %p98 = scmp.ne.s32.totalorder %s87, %s90
    %p99 = scmp.eq.s32.totalorder %s14, 1
    %p100 = por %p98, %p99
    %p101 = scmp.ne.s32.totalorder %s90, %s91
    %p102 = scmp.eq.s32.totalorder %s14, 0
    %p103 = por %p101, %p102
    %p104 = scmp.ne.s32.totalorder %s90, %s91
    %p105 = scmp.eq.s32.totalorder %s15, 1
    %p106 = por %p104, %p105
    %p108 = scmp.ne.s32.totalorder %s91, %s107
    %p109 = scmp.eq.s32.totalorder %s15, 0
    %p110 = por %p108, %p109
    %p111 = scmp.le.s32.totalorder 1, %s9
    %p112 = scmp.lt.s32.totalorder %s9, 3
    %p113 = pnand %p111, %p112
    %p114 = pneg %p113
    // Predicated region
    $region9: #{attention_upsample.1} parent=5 // pred_check
      _
    $region10: #{attention_upsample.1} parent=5 // pred_check_branch
      %116 = sbr.rel (%p113) target = $region12
    $region11: #{attention_upsample.1} parent=5 // pred_region
      %s117 = ssub.s32 %s9, 1
      // Predicated region
      $region13: #{attention_upsample.1} parent=11 // pred_check
        %p118 = pneg %p56
      $region14: #{attention_upsample.1} parent=11 // pred_check_branch
        %120 = sbr.rel (%p118) target = $region16
      $region15: #{attention_upsample.1} parent=11 // pred_region
        _
      $region16: #{attention_upsample.1} parent=11 // pred_fallthru
        _
      // Predicated region
      $region17: #{attention_upsample.1} parent=11 // pred_check
        %p121 = pneg %p77
      $region18: #{attention_upsample.1} parent=11 // pred_check_branch
        %123 = sbr.rel (%p121) target = $region20
      $region19: #{attention_upsample.1} parent=11 // pred_region
        _
      $region20: #{attention_upsample.1} parent=11 // pred_fallthru
        _
    $region12: #{attention_upsample.1} parent=5 // pred_fallthru
      _
    %p124 = scmp.lt.s32.totalorder %s9, 2
    // Predicated region
    $region21: #{attention_upsample.1} parent=5 // pred_check
      %p125 = pneg %p124
    $region22: #{attention_upsample.1} parent=5 // pred_check_branch
      %127 = sbr.rel (%p125) target = $region24
    $region23: #{attention_upsample.1} parent=5 // pred_region
      // Predicated region
      $region25: #{attention_upsample.1} parent=23 // pred_check
        %p128 = pneg %p29
      $region26: #{attention_upsample.1} parent=23 // pred_check_branch
        %130 = sbr.rel (%p128) target = $region28
      $region27: #{attention_upsample.1} parent=23 // pred_region
        %p131 = scmp.lt.s32.totalorder %s9, 1
        %s132 = scalar_select %p131, %s9, 1
        %s133 = smul.addr %s132, 2
        %s134 = smul.addr %s133, 8
        %s135 = scalar_lea.vmem %s0, %s134
      $region28: #{attention_upsample.1} parent=23 // pred_fallthru
        _
    $region24: #{attention_upsample.1} parent=5 // pred_fallthru
      _
    %p136 = scmp.le.s32.totalorder 1, %s9
    %p137 = scmp.lt.s32.totalorder %s9, 3
    %p138 = pnand %p136, %p137
    %p139 = pneg %p138
    // Predicated region
    $region29: #{attention_upsample.1} parent=5 // pred_check
      _
    $region30: #{attention_upsample.1} parent=5 // pred_check_branch
      %141 = sbr.rel (%p138) target = $region32
    $region31: #{attention_upsample.1} parent=5 // pred_region
      %s142 = ssub.s32 %s9, 1
      %p143 = scmp.lt.s32.totalorder %s14, 1
      %s144 = scalar_select %p143, %s14, 1
      %s145 = smul.addr %s144, 2
      %s146 = smul.addr %s145, 8
      %s147 = scalar_lea.vmem %s0, %s146
      %p148 = pneg %p35
      %p149 = pneg %p32
      %p150 = pneg %p56
      %p151 = pneg %p53
      %p152 = pneg %p77
      %p153 = pneg %p74
      %p154 = pneg %p103
      %p155 = pneg %p100
      %p156 = scmp.lt.s32.totalorder %s14, 1
      %s157 = scalar_select %p156, %s14, 1
      %s158 = smul.addr %s157, 8
      %s159 = scalar_lea.vmem %s3, %s158
      %p160 = scmp.lt.s32.totalorder %s14, 1
      %s161 = scalar_select %p160, %s14, 1
      %s162 = smul.addr %s161, 2
      %s163 = smul.addr %s162, 8
      %s164 = scalar_lea.vmem %s0, %s163
      %p165 = scmp.lt.s32.totalorder %s14, 1
      %s166 = scalar_select %p165, %s14, 1
      %s167 = smul.addr %s166, 8
      %s168 = scalar_lea.vmem %s3, %s167
      %v169 = vlaneseq
      %vm170 = vcmp.ge.s32.totalorder %v169, 0
      %vm171 = vcmp.lt.s32.totalorder %v169, 320
      %vm172 = vmand %vm170, %vm171
      %173 = vst.msk [vmem:[#allocation2] ss:$8 sm:$0x7] %vm172, 0.0
      %174 = vst.msk [vmem:[#allocation2] ss:$8 sm:$0x0] %vm172, 0.0
      %s175 = scalar_lea.vmem [#allocation2], 25
      %176 = vst.msk [vmem:[%s175] ss:$8 sm:$0x7] %vm172, 0.0
      %177 = vst.msk [vmem:[%s175] ss:$8 sm:$0x0] %vm172, 0.0
      %vm178 = vcmask 261121
      %179 = vst.msk [vmem:[#allocation2] sm:$0xfe] %vm178, 0.0
      %vm180 = vcmask 253952
      %181 = vst.msk [vmem:[#allocation2 + $0x18] sm:$0x1] %vm180, 0.0
      %vm182 = vcmask 523521
      %183 = vst.msk [vmem:[#allocation2 + $0x10] sm:$0xfe] %vm182, 0.0
      %vm184 = vcmask 516352
      %185 = vst.msk [vmem:[#allocation2 + $0x28] sm:$0x1] %vm184, 0.0
      %v186 = vld [vmem:[%s164] sm:$0xff]
      %v187 = vld [vmem:[%s164 + $0x8] sm:$0xff]
      %v190 = vrot.slane %v186, 7
      %v191 = vrot.slane %v187, 7
      %192 = vrot.lane.b32.xlu0 %v190, 32
      %v193 = vpop.permute.xlu0 %192
      %194 = vrot.lane.b32.xlu0 %v191, 32
      %v195 = vpop.permute.xlu0 %194
      %vm196 = vcmask 261120
      %v197 = vsel %vm196, %v193, %v195
      %vm201 = vcmask 1047809
      %202 = vst.msk [vmem:[#allocation2] sm:$0xfe] %vm201, %v193
      %203 = vst [vmem:[#allocation2 + $0x8] sm:$0xfe] %v197
      %204 = vst.msk [vmem:[#allocation2 + $0x10] sm:$0xfe] %vm178, %v195
      %vm205 = vcmask 1040640
      %206 = vst.msk [vmem:[#allocation2 + $0x18] sm:$0x1] %vm205, %v193
      %207 = vst [vmem:[#allocation2 + $0x20] sm:$0x1] %v197
      %208 = vst.msk [vmem:[#allocation2 + $0x28] sm:$0x1] %vm180, %v195
      %v209 = vld [vmem:[#allocation2] sm:$0xff]
      %v210 = vld [vmem:[#allocation2 + $0x8] sm:$0xff]
      %v211 = vld [vmem:[#allocation2 + $0x10] sm:$0xff]
      %v212 = vld [vmem:[%s1] sm:$0xff]
      %v213 = vld [vmem:[%s1 + $0x8] sm:$0xff]
      %v214 = vld [vmem:[%s1 + $0x10] sm:$0xff]
      %v215 = vld [vmem:[%s1 + $0x18] sm:$0xff]
      %v216 = vld [vmem:[%s1 + $0x20] sm:$0xff]
      %v217 = vld [vmem:[%s1 + $0x28] sm:$0xff]
      %v218 = vld [vmem:[%s1 + $0x30] sm:$0xff]
      %v219 = vld [vmem:[%s1 + $0x38] sm:$0xff]
      %v220 = vld [vmem:[%s1 + $0x40] sm:$0xff]
      %v221 = vld [vmem:[%s1 + $0x48] sm:$0xff]
      %v222 = vld [vmem:[%s1 + $0x50] sm:$0xff]
      %v223 = vld [vmem:[%s1 + $0x58] sm:$0xff]
      %v224 = vld [vmem:[%s1 + $0x60] sm:$0xff]
      %v225 = vld [vmem:[%s1 + $0x68] sm:$0xff]
      %v226 = vld [vmem:[%s1 + $0x70] sm:$0xff]
      %v227 = vld [vmem:[%s1 + $0x78] sm:$0xff]
      %v228 = vld [vmem:[%s1 + $0x80] sm:$0xff]
      %v229 = vld [vmem:[%s1 + $0x88] sm:$0xff]
      %v230 = vld [vmem:[%s1 + $0x90] sm:$0xff]
      %v231 = vld [vmem:[%s1 + $0x98] sm:$0xff]
      %v232 = vld [vmem:[%s1 + $0xa0] sm:$0xff]
      %v233 = vld [vmem:[%s1 + $0xa8] sm:$0xff]
      %v234 = vld [vmem:[%s1 + $0xb0] sm:$0xff]
      %v235 = vld [vmem:[%s1 + $0xb8] sm:$0xff]
      %v236 = vld [vmem:[%s1 + $0xc0] sm:$0xff]
      %v237 = vld [vmem:[%s1 + $0xc8] sm:$0xff]
      %v238 = vld [vmem:[%s1 + $0xd0] sm:$0xff]
      %v239 = vld [vmem:[%s1 + $0xd8] sm:$0xff]
      %v240 = vld [vmem:[%s1 + $0xe0] sm:$0xff]
      %v241 = vld [vmem:[%s1 + $0xe8] sm:$0xff]
      %v242 = vld [vmem:[%s1 + $0xf0] sm:$0xff]
      %v243 = vld [vmem:[%s1 + $0xf8] sm:$0xff]
      %v244 = vld [vmem:[%s1 + $0x100] sm:$0xff]
      %v245 = vld [vmem:[%s1 + $0x108] sm:$0xff]
      %v246 = vld [vmem:[%s1 + $0x110] sm:$0xff]
      %v247 = vld [vmem:[%s1 + $0x118] sm:$0xff]
      %v248 = vld [vmem:[%s1 + $0x120] sm:$0xff]
      %v249 = vld [vmem:[%s1 + $0x128] sm:$0xff]
      %v250 = vld [vmem:[%s1 + $0x130] sm:$0xff]
      %v251 = vld [vmem:[%s1 + $0x138] sm:$0xff]
      %v252 = vld [vmem:[#allocation2] sm:$0xfe]
      %v253 = vld [vmem:[#allocation2 + $0x8] sm:$0xfe]
      %v254 = vld [vmem:[#allocation2 + $0x10] sm:$0xfe]
      %v255 = vld [vmem:[#allocation2 + $0x18] sm:$0x1]
      %v256 = vld [vmem:[#allocation2 + $0x20] sm:$0x1]
      %v257 = vld [vmem:[#allocation2 + $0x28] sm:$0x1]
      %s258 = scalar_lea.vmem %s1, 320
      %v259 = vld [vmem:[%s258] sm:$0xff]
      %v260 = vld [vmem:[%s258 + $0x8] sm:$0xff]
      %v261 = vld [vmem:[%s258 + $0x10] sm:$0xff]
      %v262 = vld [vmem:[%s258 + $0x18] sm:$0xff]
      %v263 = vld [vmem:[%s258 + $0x20] sm:$0xff]
      %v264 = vld [vmem:[%s258 + $0x28] sm:$0xff]
      %v265 = vld [vmem:[%s258 + $0x30] sm:$0xff]
      %v266 = vld [vmem:[%s258 + $0x38] sm:$0xff]
      %v267 = vld [vmem:[%s258 + $0x40] sm:$0xff]
      %v268 = vld [vmem:[%s258 + $0x48] sm:$0xff]
      %v269 = vld [vmem:[%s258 + $0x50] sm:$0xff]
      %v270 = vld [vmem:[%s258 + $0x58] sm:$0xff]
      %v271 = vld [vmem:[%s258 + $0x60] sm:$0xff]
      %v272 = vld [vmem:[%s258 + $0x68] sm:$0xff]
      %v273 = vld [vmem:[%s258 + $0x70] sm:$0xff]
      %v274 = vld [vmem:[%s258 + $0x78] sm:$0xff]
      %v275 = vld [vmem:[%s258 + $0x80] sm:$0xff]
      %v276 = vld [vmem:[%s258 + $0x88] sm:$0xff]
      %v277 = vld [vmem:[%s258 + $0x90] sm:$0xff]
      %v278 = vld [vmem:[%s258 + $0x98] sm:$0xff]
      %v279 = vld [vmem:[%s258 + $0xa0] sm:$0xff]
      %v280 = vld [vmem:[%s258 + $0xa8] sm:$0xff]
      %v281 = vld [vmem:[%s258 + $0xb0] sm:$0xff]
      %v282 = vld [vmem:[%s258 + $0xb8] sm:$0xff]
      %v283 = vld [vmem:[%s258 + $0xc0] sm:$0xff]
      %v284 = vld [vmem:[%s258 + $0xc8] sm:$0xff]
      %v285 = vld [vmem:[%s258 + $0xd0] sm:$0xff]
      %v286 = vld [vmem:[%s258 + $0xd8] sm:$0xff]
      %v287 = vld [vmem:[%s258 + $0xe0] sm:$0xff]
      %v288 = vld [vmem:[%s258 + $0xe8] sm:$0xff]
      %v289 = vld [vmem:[%s258 + $0xf0] sm:$0xff]
      %v290 = vld [vmem:[%s258 + $0xf8] sm:$0xff]
      %v291 = vld [vmem:[%s258 + $0x100] sm:$0xff]
      %v292 = vld [vmem:[%s258 + $0x108] sm:$0xff]
      %v293 = vld [vmem:[%s258 + $0x110] sm:$0xff]
      %v294 = vld [vmem:[%s258 + $0x118] sm:$0xff]
      %v295 = vld [vmem:[%s258 + $0x120] sm:$0xff]
      %v296 = vld [vmem:[%s258 + $0x128] sm:$0xff]
      %v297 = vld [vmem:[%s258 + $0x130] sm:$0xff]
      %v298 = vld [vmem:[%s258 + $0x138] sm:$0xff]
      %vm305 = vcmask 1046528
      %v306 = vrot.slane %v252, 1
      %v307 = vrot.slane %v255, 1
      %v308 = vsel %vm305, %v306, %v307
      %v309 = vrot.slane %v253, 1
      %v310 = vrot.slane %v256, 1
      %v311 = vsel %vm305, %v309, %v310
      %v312 = vrot.slane %v254, 1
      %v313 = vrot.slane %v257, 1
      %v314 = vsel %vm305, %v312, %v313
      %vm317 = vcmask 523264
      %v318 = vsel %vm317, %v314, 0
      %320 = vmatpush.msra.mxu0 %v274
      %321 = vmatpush.msra.mxu0 %v273
      %322 = vmatpush.msra.mxu0 %v272
      %323 = vmatpush.msra.mxu0 %v271
      %324 = vmatpush.msra.mxu0 %v270
      %325 = vmatpush.msra.mxu0 %v269
      %326 = vmatpush.msra.mxu0 %v268
      %327 = vmatpush.msra.mxu0 %v267
      %328 = vmatpush.msra.mxu0 %v266
      %329 = vmatpush.msra.mxu0 %v265
      %330 = vmatpush.msra.mxu0 %v264
      %331 = vmatpush.msra.mxu0 %v263
      %332 = vmatpush.msra.mxu0 %v262
      %333 = vmatpush.msra.mxu0 %v261
      %334 = vmatpush.msra.mxu0 %v260
      %335 = vmatpush.msra.mxu0 %v259
      %336 = vmatmul.f32.gmra.mxu0 %v308
      %v337 = vpop.f32.mrf.mxu0
      %v338 = vadd.f32 0.0, %v337
      %339 = vdwg.mxu0
      %340 = vmatpush.msra.mxu0 %v290
      %341 = vmatpush.msra.mxu0 %v289
      %342 = vmatpush.msra.mxu0 %v288
      %343 = vmatpush.msra.mxu0 %v287
      %344 = vmatpush.msra.mxu0 %v286
      %345 = vmatpush.msra.mxu0 %v285
      %346 = vmatpush.msra.mxu0 %v284
      %347 = vmatpush.msra.mxu0 %v283
      %348 = vmatpush.msra.mxu0 %v282
      %349 = vmatpush.msra.mxu0 %v281
      %350 = vmatpush.msra.mxu0 %v280
      %351 = vmatpush.msra.mxu0 %v279
      %352 = vmatpush.msra.mxu0 %v278
      %353 = vmatpush.msra.mxu0 %v277
      %354 = vmatpush.msra.mxu0 %v276
      %355 = vmatpush.msra.mxu0 %v275
      %356 = vmatmul.f32.gmra.mxu0 %v311
      %v357 = vpop.f32.mrf.mxu0
      %v358 = vadd.f32 %v338, %v357
      %359 = vdwg.mxu0
      %360 = vmatpush.msra.mxu0 0.0
      %361 = vmatpush.msra.mxu0 0.0
      %362 = vmatpush.msra.mxu0 0.0
      %363 = vmatpush.msra.mxu0 0.0
      %364 = vmatpush.msra.mxu0 0.0
      %365 = vmatpush.msra.mxu0 0.0
      %366 = vmatpush.msra.mxu0 0.0
      %367 = vmatpush.msra.mxu0 0.0
      %368 = vmatpush.msra.mxu0 %v298
      %369 = vmatpush.msra.mxu0 %v297
      %370 = vmatpush.msra.mxu0 %v296
      %371 = vmatpush.msra.mxu0 %v295
      %372 = vmatpush.msra.mxu0 %v294
      %373 = vmatpush.msra.mxu0 %v293
      %374 = vmatpush.msra.mxu0 %v292
      %375 = vmatpush.msra.mxu0 %v291
      %376 = vmatmul.f32.gmra.mxu0 %v318
      %v377 = vpop.f32.mrf.mxu0
      %v378 = vadd.f32 %v358, %v377
      %379 = vdwg.mxu0
      %v381 = vsel %vm317, %v211, 0
      %383 = vmatpush.msra.mxu0 %v227
      %384 = vmatpush.msra.mxu0 %v226
      %385 = vmatpush.msra.mxu0 %v225
      %386 = vmatpush.msra.mxu0 %v224
      %387 = vmatpush.msra.mxu0 %v223
      %388 = vmatpush.msra.mxu0 %v222
      %389 = vmatpush.msra.mxu0 %v221
      %390 = vmatpush.msra.mxu0 %v220
      %391 = vmatpush.msra.mxu0 %v219
      %392 = vmatpush.msra.mxu0 %v218
      %393 = vmatpush.msra.mxu0 %v217
      %394 = vmatpush.msra.mxu0 %v216
      %395 = vmatpush.msra.mxu0 %v215
      %396 = vmatpush.msra.mxu0 %v214
      %397 = vmatpush.msra.mxu0 %v213
      %398 = vmatpush.msra.mxu0 %v212
      %399 = vmatmul.f32.gmra.mxu0 %v209
      %v400 = vpop.f32.mrf.mxu0
      %v401 = vadd.f32 %v378, %v400
      %402 = vdwg.mxu0
      %403 = vmatpush.msra.mxu0 %v243
      %404 = vmatpush.msra.mxu0 %v242
      %405 = vmatpush.msra.mxu0 %v241
      %406 = vmatpush.msra.mxu0 %v240
      %407 = vmatpush.msra.mxu0 %v239
      %408 = vmatpush.msra.mxu0 %v238
      %409 = vmatpush.msra.mxu0 %v237
      %410 = vmatpush.msra.mxu0 %v236
      %411 = vmatpush.msra.mxu0 %v235
      %412 = vmatpush.msra.mxu0 %v234
      %413 = vmatpush.msra.mxu0 %v233
      %414 = vmatpush.msra.mxu0 %v232
      %415 = vmatpush.msra.mxu0 %v231
      %416 = vmatpush.msra.mxu0 %v230
      %417 = vmatpush.msra.mxu0 %v229
      %418 = vmatpush.msra.mxu0 %v228
      %419 = vmatmul.f32.gmra.mxu0 %v210
      %v420 = vpop.f32.mrf.mxu0
      %v421 = vadd.f32 %v401, %v420
      %422 = vdwg.mxu0
      %423 = vmatpush.msra.mxu0 0.0
      %424 = vmatpush.msra.mxu0 0.0
      %425 = vmatpush.msra.mxu0 0.0
      %426 = vmatpush.msra.mxu0 0.0
      %427 = vmatpush.msra.mxu0 0.0
      %428 = vmatpush.msra.mxu0 0.0
      %429 = vmatpush.msra.mxu0 0.0
      %430 = vmatpush.msra.mxu0 0.0
      %431 = vmatpush.msra.mxu0 %v251
      %432 = vmatpush.msra.mxu0 %v250
      %433 = vmatpush.msra.mxu0 %v249
      %434 = vmatpush.msra.mxu0 %v248
      %435 = vmatpush.msra.mxu0 %v247
      %436 = vmatpush.msra.mxu0 %v246
      %437 = vmatpush.msra.mxu0 %v245
      %438 = vmatpush.msra.mxu0 %v244
      %439 = vmatmul.f32.gmra.mxu0 %v381
      %v440 = vpop.f32.mrf.mxu0
      %v441 = vadd.f32 %v421, %v440
      %442 = vdwg.mxu0
      %v443 = vld [vmem:[#allocation2] sm:$0xfc]
      %v444 = vld [vmem:[#allocation2 + $0x8] sm:$0xfc]
      %v445 = vld [vmem:[#allocation2 + $0x10] sm:$0xfc]
      %v446 = vld [vmem:[#allocation2 + $0x18] sm:$0x3]
      %v447 = vld [vmem:[#allocation2 + $0x20] sm:$0x3]
      %v448 = vld [vmem:[#allocation2 + $0x28] sm:$0x3]
      %s449 = scalar_lea.vmem %s1, 640
      %v450 = vld [vmem:[%s449] sm:$0xff]
      %v451 = vld [vmem:[%s449 + $0x8] sm:$0xff]
      %v452 = vld [vmem:[%s449 + $0x10] sm:$0xff]
      %v453 = vld [vmem:[%s449 + $0x18] sm:$0xff]
      %v454 = vld [vmem:[%s449 + $0x20] sm:$0xff]
      %v455 = vld [vmem:[%s449 + $0x28] sm:$0xff]
      %v456 = vld [vmem:[%s449 + $0x30] sm:$0xff]
      %v457 = vld [vmem:[%s449 + $0x38] sm:$0xff]
      %v458 = vld [vmem:[%s449 + $0x40] sm:$0xff]
      %v459 = vld [vmem:[%s449 + $0x48] sm:$0xff]
      %v460 = vld [vmem:[%s449 + $0x50] sm:$0xff]
      %v461 = vld [vmem:[%s449 + $0x58] sm:$0xff]
      %v462 = vld [vmem:[%s449 + $0x60] sm:$0xff]
      %v463 = vld [vmem:[%s449 + $0x68] sm:$0xff]
      %v464 = vld [vmem:[%s449 + $0x70] sm:$0xff]
      %v465 = vld [vmem:[%s449 + $0x78] sm:$0xff]
      %v466 = vld [vmem:[%s449 + $0x80] sm:$0xff]
      %v467 = vld [vmem:[%s449 + $0x88] sm:$0xff]
      %v468 = vld [vmem:[%s449 + $0x90] sm:$0xff]
      %v469 = vld [vmem:[%s449 + $0x98] sm:$0xff]
      %v470 = vld [vmem:[%s449 + $0xa0] sm:$0xff]
      %v471 = vld [vmem:[%s449 + $0xa8] sm:$0xff]
      %v472 = vld [vmem:[%s449 + $0xb0] sm:$0xff]
      %v473 = vld [vmem:[%s449 + $0xb8] sm:$0xff]
      %v474 = vld [vmem:[%s449 + $0xc0] sm:$0xff]
      %v475 = vld [vmem:[%s449 + $0xc8] sm:$0xff]
      %v476 = vld [vmem:[%s449 + $0xd0] sm:$0xff]
      %v477 = vld [vmem:[%s449 + $0xd8] sm:$0xff]
      %v478 = vld [vmem:[%s449 + $0xe0] sm:$0xff]
      %v479 = vld [vmem:[%s449 + $0xe8] sm:$0xff]
      %v480 = vld [vmem:[%s449 + $0xf0] sm:$0xff]
      %v481 = vld [vmem:[%s449 + $0xf8] sm:$0xff]
      %v482 = vld [vmem:[%s449 + $0x100] sm:$0xff]
      %v483 = vld [vmem:[%s449 + $0x108] sm:$0xff]
      %v484 = vld [vmem:[%s449 + $0x110] sm:$0xff]
      %v485 = vld [vmem:[%s449 + $0x118] sm:$0xff]
      %v486 = vld [vmem:[%s449 + $0x120] sm:$0xff]
      %v487 = vld [vmem:[%s449 + $0x128] sm:$0xff]
      %v488 = vld [vmem:[%s449 + $0x130] sm:$0xff]
      %v489 = vld [vmem:[%s449 + $0x138] sm:$0xff]
      %vm496 = vcmask 1045504
      %v497 = vrot.slane %v443, 2
      %v498 = vrot.slane %v446, 2
      %v499 = vsel %vm496, %v497, %v498
      %v500 = vrot.slane %v444, 2
      %v501 = vrot.slane %v447, 2
      %v502 = vsel %vm496, %v500, %v501
      %v503 = vrot.slane %v445, 2
      %v504 = vrot.slane %v448, 2
      %v505 = vsel %vm496, %v503, %v504
      %v508 = vsel %vm317, %v505, 0
      %510 = vmatpush.msra.mxu0 %v465
      %511 = vmatpush.msra.mxu0 %v464
      %512 = vmatpush.msra.mxu0 %v463
      %513 = vmatpush.msra.mxu0 %v462
      %514 = vmatpush.msra.mxu0 %v461
      %515 = vmatpush.msra.mxu0 %v460
      %516 = vmatpush.msra.mxu0 %v459
      %517 = vmatpush.msra.mxu0 %v458
      %518 = vmatpush.msra.mxu0 %v457
      %519 = vmatpush.msra.mxu0 %v456
      %520 = vmatpush.msra.mxu0 %v455
      %521 = vmatpush.msra.mxu0 %v454
      %522 = vmatpush.msra.mxu0 %v453
      %523 = vmatpush.msra.mxu0 %v452
      %524 = vmatpush.msra.mxu0 %v451
      %525 = vmatpush.msra.mxu0 %v450
      %526 = vmatmul.f32.gmra.mxu0 %v499
      %v527 = vpop.f32.mrf.mxu0
      %v528 = vadd.f32 0.0, %v527
      %529 = vdwg.mxu0
      %530 = vmatpush.msra.mxu0 %v481
      %531 = vmatpush.msra.mxu0 %v480
      %532 = vmatpush.msra.mxu0 %v479
      %533 = vmatpush.msra.mxu0 %v478
      %534 = vmatpush.msra.mxu0 %v477
      %535 = vmatpush.msra.mxu0 %v476
      %536 = vmatpush.msra.mxu0 %v475
      %537 = vmatpush.msra.mxu0 %v474
      %538 = vmatpush.msra.mxu0 %v473
      %539 = vmatpush.msra.mxu0 %v472
      %540 = vmatpush.msra.mxu0 %v471
      %541 = vmatpush.msra.mxu0 %v470
      %542 = vmatpush.msra.mxu0 %v469
      %543 = vmatpush.msra.mxu0 %v468
      %544 = vmatpush.msra.mxu0 %v467
      %545 = vmatpush.msra.mxu0 %v466
      %546 = vmatmul.f32.gmra.mxu0 %v502
      %v547 = vpop.f32.mrf.mxu0
      %v548 = vadd.f32 %v528, %v547
      %549 = vdwg.mxu0
      %550 = vmatpush.msra.mxu0 0.0
      %551 = vmatpush.msra.mxu0 0.0
      %552 = vmatpush.msra.mxu0 0.0
      %553 = vmatpush.msra.mxu0 0.0
      %554 = vmatpush.msra.mxu0 0.0
      %555 = vmatpush.msra.mxu0 0.0
      %556 = vmatpush.msra.mxu0 0.0
      %557 = vmatpush.msra.mxu0 0.0
      %558 = vmatpush.msra.mxu0 %v489
      %559 = vmatpush.msra.mxu0 %v488
      %560 = vmatpush.msra.mxu0 %v487
      %561 = vmatpush.msra.mxu0 %v486
      %562 = vmatpush.msra.mxu0 %v485
      %563 = vmatpush.msra.mxu0 %v484
      %564 = vmatpush.msra.mxu0 %v483
      %565 = vmatpush.msra.mxu0 %v482
      %566 = vmatmul.f32.gmra.mxu0 %v508
      %v567 = vpop.f32.mrf.mxu0
      %v568 = vadd.f32 %v548, %v567
      %569 = vdwg.mxu0
      %v570 = vadd.f32 %v441, %v568
      %v571 = vld [vmem:[%s2] sm:$0x1]
      %v573 = vperm.slane %v571, 0
      %v575 = vadd.f32 %v570, %v573
      %576 = vst [vmem:[%s168] sm:$0xff] %v575
      %p577 = scmp.lt.s32.totalorder %s14, 1
      %s578 = scalar_select %p577, %s14, 1
      %s579 = smul.addr %s578, 8
      %s580 = scalar_lea.vmem %s3, %s579
      // Predicated region
      $region33: #{attention_upsample.1} parent=31 // pred_check
        %p581 = pneg %p100
      $region34: #{attention_upsample.1} parent=31 // pred_check_branch
        %583 = sbr.rel (%p581) target = $region36
      $region35: #{attention_upsample.1} parent=31 // pred_region
        _
      $region36: #{attention_upsample.1} parent=31 // pred_fallthru
        _
    $region32: #{attention_upsample.1} parent=5 // pred_fallthru
      _
    %p584 = scmp.le.s32.totalorder 2, %s9
    // Predicated region
    $region37: #{attention_upsample.1} parent=5 // pred_check
      %p585 = pneg %p584
    $region38: #{attention_upsample.1} parent=5 // pred_check_branch
      %587 = sbr.rel (%p585) target = $region40
    $region39: #{attention_upsample.1} parent=5 // pred_region
      %s588 = ssub.s32 %s9, 2
      // Predicated region
      $region41: #{attention_upsample.1} parent=39 // pred_check
        %p589 = pneg %p106
      $region42: #{attention_upsample.1} parent=39 // pred_check_branch
        %591 = sbr.rel (%p589) target = $region44
      $region43: #{attention_upsample.1} parent=39 // pred_region
        %p592 = scmp.lt.s32.totalorder %s15, 1
        %s593 = scalar_select %p592, %s15, 1
        %s594 = smul.addr %s593, 8
        %s595 = scalar_lea.vmem %s3, %s594
      $region44: #{attention_upsample.1} parent=39 // pred_fallthru
        _
    $region40: #{attention_upsample.1} parent=5 // pred_fallthru
      _
  $region6: #{attention_upsample.1} parent=0 // loop_footer
    %s13 = sadd.s32 1, %s9
  $region7: #{attention_upsample.1} parent=0 // loop_footer_branch
    %8 = sbr.rel target = $region3
  $region8: #{attention_upsample.1} parent=0 // loop_exit
    _

</llo_original>
